<compile_context>
chip_gen: v6e
topology: v6e:2x2x1
jax: 0.10.0
libtpu: 0.0.40
codegen_flags: <defaults>
</compile_context>

<pallas_src>
import functools

import jax
import jax.numpy as jnp
from jax.experimental import pallas as pl
from jax.experimental.pallas import tpu as pltpu


def weighted_choice_loss_kernel(out_ref, tgt_ref, w_ref, loss_ref, *, beta):
    logits = out_ref[...].astype(jnp.float32)      # (TB, C) f32
    tgt = tgt_ref[...]                             # (TB, 1) int32
    w = w_ref[...].astype(jnp.float32)             # (TB, 1) f32
    TB, C = logits.shape

    # Numerically-stable log-sum-exp along the class axis.
    m = jnp.max(logits, axis=1, keepdims=True)                     # (TB, 1)
    shifted = logits - m                                           # (TB, C)
    lse = jnp.log(jnp.sum(jnp.exp(shifted), axis=1, keepdims=True))  # (TB, 1)

    # Selected (shifted) logit per row via iota compare -> masked reduce.
    # Equivalent to -(one_hot * log_softmax).sum(1) == lse - shifted[target].
    class_ids = jax.lax.broadcasted_iota(jnp.int32, (TB, C), 1)
    picked = jnp.sum(jnp.where(class_ids == tgt, shifted, 0.0),
                     axis=1, keepdims=True)                        # (TB, 1)
    raw = lse - picked                                             # (TB, 1)

    # beta*(loss*w) + (1-w)*loss  ==  loss * (1 + w*(beta-1))
    loss_ref[...] = raw * (1.0 + w * (beta - 1.0))


def _pick_batch_tile(B, C):
    """Pick a batch tile: multiple of 8, ~2 MiB f32 working set per tile."""
    budget_bytes = 2 * 1024 * 1024
    tb = budget_bytes // max(C * 4, 1)
    tb = max(8, min(512, tb))
    tb = (tb // 8) * 8
    b_padded = ((B + 7) // 8) * 8
    return min(tb, b_padded)


def weighted_choice_loss(output, target, weight, beta):
    """output: (B, C) float, target: (B,) int, weight: (B,) float -> scalar f32."""
    B, C = output.shape
    tb = _pick_batch_tile(B, C)
    num_tiles = pl.cdiv(B, tb)
    Bp = num_tiles * tb

    if Bp != B:
        output = jnp.pad(output, ((0, Bp - B), (0, 0)))
        target = jnp.pad(target, (0, Bp - B))
        weight = jnp.pad(weight, (0, Bp - B))

    kernel = functools.partial(weighted_choice_loss_kernel, beta=float(beta))

    per_row = pl.pallas_call(
        kernel,
        out_shape=jax.ShapeDtypeStruct((Bp, 1), jnp.float32),
        grid=(num_tiles,),
        in_specs=[
            pl.BlockSpec((tb, C), lambda i: (i, 0)),   # logits tile (native dtype)
            pl.BlockSpec((tb, 1), lambda i: (i, 0)),   # target column
            pl.BlockSpec((tb, 1), lambda i: (i, 0)),   # weight column
        ],
        out_specs=pl.BlockSpec((tb, 1), lambda i: (i, 0)),
        compiler_params=pltpu.CompilerParams(
            dimension_semantics=("parallel",),
            vmem_limit_bytes=32 * 1024 * 1024,
        ),
    )(
        output,                                        # no wrapper-side upcast
        target.reshape(Bp, 1).astype(jnp.int32),
        weight.reshape(Bp, 1).astype(jnp.float32),
    )

    # Final mean: only the real B rows, divide by the true B.
    return jnp.sum(per_row[:B, 0]) / jnp.float32(B)


def _reference(output, target, weight, beta):
    log_prb = jax.nn.log_softmax(output.astype(jnp.float32), axis=1)
    one_hot = jax.nn.one_hot(target, output.shape[1], dtype=jnp.float32)
    loss = -(one_hot * log_prb).sum(1)
    loss = beta * (loss * weight) + (1.0 - weight) * loss
    return loss.mean()


if __name__ == "__main__":
    key = jax.random.PRNGKey(0)
    k1, k2, k3 = jax.random.split(key, 3)

    beta = 0.5

    # Case 1: small, aligned batch (matches the module's (B, C) contract).
    B, C = 8, 32
    output = jax.random.normal(k1, (B, C), dtype=jnp.float32)
    target = jax.random.randint(k2, (B,), 0, C, dtype=jnp.int32)
    weight = jax.random.bernoulli(k3, 0.5, (B,)).astype(jnp.float32)

    loss = weighted_choice_loss(output, target, weight, beta)
    jax.block_until_ready(loss)
    ref = _reference(output, target, weight, beta)
    assert jnp.allclose(loss, ref, atol=1e-5, rtol=1e-5), (loss, ref)

    # Case 2: non-multiple-of-8 batch exercises the padded last tile.
    B2, C2 = 20, 32
    k4, k5, k6 = jax.random.split(k1, 3)
    output2 = jax.random.normal(k4, (B2, C2), dtype=jnp.float32)
    target2 = jax.random.randint(k5, (B2,), 0, C2, dtype=jnp.int32)
    weight2 = jax.random.bernoulli(k6, 0.5, (B2,)).astype(jnp.float32)

    loss2 = weighted_choice_loss(output2, target2, weight2, beta)
    jax.block_until_ready(loss2)
    ref2 = _reference(output2, target2, weight2, beta)
    assert jnp.allclose(loss2, ref2, atol=1e-5, rtol=1e-5), (loss2, ref2)

    print("KERNEL_OK")
</pallas_src>

<mosaic_0001>
module attributes {stable_mosaic.version = 11 : i64} {
  func.func @weighted_choice_loss_kernel(%arg0: i32, %arg1: memref<8x32xf32, #tpu.memory_space<vmem>>, %arg2: memref<8x1xi32, #tpu.memory_space<vmem>>, %arg3: memref<8x1xf32, #tpu.memory_space<vmem>>, %arg4: memref<8x1xf32, #tpu.memory_space<vmem>>) attributes {dimension_semantics = [#tpu.dimension_semantics<parallel>], iteration_bounds = array<i64: 1>, scalar_prefetch = 0 : i64, scratch_operands = 0 : i64, tpu.core_type = #tpu.core_type<tc>, window_params = [{transform_indices = @transform_0, window_bounds = array<i64: 8, 32>}, {transform_indices = @transform_1, window_bounds = array<i64: 8, 1>}, {transform_indices = @transform_2, window_bounds = array<i64: 8, 1>}, {transform_indices = @transform_3, window_bounds = array<i64: 8, 1>}]} {
    %c0 = arith.constant 0 : index
    %c0_0 = arith.constant 0 : index
    %0 = vector.load %arg1[%c0, %c0_0] : memref<8x32xf32, #tpu.memory_space<vmem>>, vector<8x32xf32>
    %c0_1 = arith.constant 0 : index
    %c0_2 = arith.constant 0 : index
    %1 = vector.load %arg2[%c0_1, %c0_2] : memref<8x1xi32, #tpu.memory_space<vmem>>, vector<8x1xi32>
    %c0_3 = arith.constant 0 : index
    %c0_4 = arith.constant 0 : index
    %2 = vector.load %arg3[%c0_3, %c0_4] : memref<8x1xf32, #tpu.memory_space<vmem>>, vector<8x1xf32>
    %cst = arith.constant dense<0xFF800000> : vector<8xf32>
    %3 = vector.multi_reduction <maximumf>, %0, %cst [1] : vector<8x32xf32> to vector<8xf32>
    %4 = vector.shape_cast %3 : vector<8xf32> to vector<8x1xf32>
    %5 = vector.broadcast %4 : vector<8x1xf32> to vector<8x32xf32>
    %6 = arith.subf %0, %5 : vector<8x32xf32>
    %7 = math.exp %6 : vector<8x32xf32>
    %cst_5 = arith.constant dense<0.000000e+00> : vector<8xf32>
    %8 = vector.multi_reduction <add>, %7, %cst_5 [1] : vector<8x32xf32> to vector<8xf32>
    %9 = vector.shape_cast %8 : vector<8xf32> to vector<8x1xf32>
    %10 = math.log %9 : vector<8x1xf32>
    %11 = tpu.iota {dimensions = array<i32: 1>} : vector<8x32xi32>
    %12 = vector.broadcast %1 : vector<8x1xi32> to vector<8x32xi32>
    %13 = arith.cmpi eq, %11, %12 : vector<8x32xi32>
    %cst_6 = arith.constant 0.000000e+00 : f32
    %14 = vector.broadcast %cst_6 : f32 to vector<8x32xf32>
    %15 = arith.select %13, %6, %14 : vector<8x32xi1>, vector<8x32xf32>
    %cst_7 = arith.constant dense<0.000000e+00> : vector<8xf32>
    %16 = vector.multi_reduction <add>, %15, %cst_7 [1] : vector<8x32xf32> to vector<8xf32>
    %17 = vector.shape_cast %16 : vector<8xf32> to vector<8x1xf32>
    %18 = arith.subf %10, %17 : vector<8x1xf32>
    %cst_8 = arith.constant -5.000000e-01 : f32
    %19 = vector.broadcast %cst_8 : f32 to vector<8x1xf32>
    %20 = arith.mulf %2, %19 : vector<8x1xf32>
    %cst_9 = arith.constant 1.000000e+00 : f32
    %21 = vector.broadcast %cst_9 : f32 to vector<8x1xf32>
    %22 = arith.addf %21, %20 : vector<8x1xf32>
    %23 = arith.mulf %18, %22 : vector<8x1xf32>
    %c0_10 = arith.constant 0 : index
    %c0_11 = arith.constant 0 : index
    %24 = vector.load %arg4[%c0_10, %c0_11] : memref<8x1xf32, #tpu.memory_space<vmem>>, vector<8x1xf32>
    tpu.vector_store %arg4[%c0_10, %c0_11], %23 {strides = array<i32>} : memref<8x1xf32, #tpu.memory_space<vmem>>, vector<8x1xf32>,
    return
  }
  func.func @transform_0(%arg0: i32) -> (i32, i32) {
    %c0_i32 = arith.constant 0 : i32
    %c0_i32_0 = arith.constant 0 : i32
    return %arg0, %c0_i32 : i32, i32
  }
  func.func @transform_1(%arg0: i32) -> (i32, i32) {
    %c0_i32 = arith.constant 0 : i32
    %c0_i32_0 = arith.constant 0 : i32
    return %arg0, %c0_i32 : i32, i32
  }
  func.func @transform_2(%arg0: i32) -> (i32, i32) {
    %c0_i32 = arith.constant 0 : i32
    %c0_i32_0 = arith.constant 0 : i32
    return %arg0, %c0_i32 : i32, i32
  }
  func.func @transform_3(%arg0: i32) -> (i32, i32) {
    %c0_i32 = arith.constant 0 : i32
    %c0_i32_0 = arith.constant 0 : i32
    return %arg0, %c0_i32 : i32, i32
  }
}

</mosaic_0001>

<llo_original>
// kernel: tpu_custom_call.1
$region0: #{tpu_custom_call.1}
  #allocation0 [shape = 'u32[]', space=smem, size = 0x4, offset = 0x4, fixed_abs, tag = 'smem constant byte address 0x4 - core index']
  #allocation1 [shape = 'u32[144,128]{1,0:T(1,128)}', space=vmem, size = 0x12000, scoped, tag = 'internal scratch']
  %s0 = inlined_call_operand.vmem [shape: f32[8,32], index: 0, kind: input, shape index: {}]
  %s1 = inlined_call_operand.vmem [shape: s32[8,1], index: 1, kind: input, shape index: {}]
  %s2 = inlined_call_operand.vmem [shape: f32[8,1], index: 2, kind: input, shape index: {}]
  %s3 = inlined_call_operand.vmem [shape: f32[8,1], index: 3, kind: output, shape index: {}]
  %s4 = sld [smem:[#allocation0]]
  $region22: #{tpu_custom_call.1} parent=0
    _
  %s6 = ssub.s32 1, %s4
  %s7 = scalar_select 0, %s6, %s4
  // Predicated region
  $region2: #{tpu_custom_call.1} parent=0 // pred_check
    _
  $region3: #{tpu_custom_call.1} parent=0 // pred_check_branch
    %9 = sbr.rel (0) target = $region5
  $region4: #{tpu_custom_call.1} parent=0 // pred_region
    _
  $region5: #{tpu_custom_call.1} parent=0 // pred_fallthru
    _
  // Predicated region
  $region6: #{tpu_custom_call.1} parent=0 // pred_check
    _
  $region7: #{tpu_custom_call.1} parent=0 // pred_check_branch
    %11 = sbr.rel (0) target = $region9
  $region8: #{tpu_custom_call.1} parent=0 // pred_region
    _
  $region9: #{tpu_custom_call.1} parent=0 // pred_fallthru
    _
  // Predicated region
  $region10: #{tpu_custom_call.1} parent=0 // pred_check
    _
  $region11: #{tpu_custom_call.1} parent=0 // pred_check_branch
    %13 = sbr.rel (0) target = $region13
  $region12: #{tpu_custom_call.1} parent=0 // pred_region
    _
  $region13: #{tpu_custom_call.1} parent=0 // pred_fallthru
    _
  %v14 = vld [vmem:[%s0] sm:$0xff]
  %v15 = vld [vmem:[%s1] sm:$0xff]
  %v16 = vld [vmem:[%s2] sm:$0xff]
  %vm17 = vcmask 261120
  %v18 = vsel %vm17, %v14, -inf
  %19 = vmax.xlane.f32.xlu0 %v18
  %v20 = vpop.xlane.xlu0 %19
  %v21 = vsub.f32 %v14, %v20
  %v22 = vmul.f32 %v21, 1.442695
  %v23 = vpow.pop %v22
  %v24 = vsel %vm17, %v23, 0.0
  %25 = vadd.xlane.f32.xlu0 %v24
  %v26 = vpop.xlane.xlu0 %25
  %v27 = vlog2.pop %v26
  %v28 = vmul.f32 %v27, 0.6931472
  %v29 = vlaneseq
  %v30 = vand.u32 %v29, 127
  %31 = vset.pattern.permute.xlu0 0
  %32 = vperm.xlu0 %31, %v15
  %v33 = vpop.permute.xlu0 %32
  %vm34 = vcmp.eq.s32.totalorder %v30, %v33
  %v35 = vsel %vm34, %v21, 0.0
  %v36 = vsel %vm17, %v35, 0.0
  %37 = vadd.xlane.f32.xlu0 %v36
  %v38 = vpop.xlane.xlu0 %37
  %v39 = vsub.f32 %v28, %v38
  %v40 = vmul.f32 %v16, -0.5
  %v41 = vadd.f32 %v40, 1.0
  %v42 = vmul.f32 %v39, %v41
  %vm43 = vcmask 7168
  %44 = vst.msk [vmem:[%s3] sm:$0xff] %vm43, %v42
  // Predicated region
  $region14: #{tpu_custom_call.1} parent=0 // pred_check
    _
  $region15: #{tpu_custom_call.1} parent=0 // pred_check_branch
    %46 = sbr.rel (0) target = $region17
  $region16: #{tpu_custom_call.1} parent=0 // pred_region
    _
  $region17: #{tpu_custom_call.1} parent=0 // pred_fallthru
    _
  // Predicated region
  $region18: #{tpu_custom_call.1} parent=0 // pred_check
    _
  $region19: #{tpu_custom_call.1} parent=0 // pred_check_branch
    %48 = sbr.rel (0) target = $region21
  $region20: #{tpu_custom_call.1} parent=0 // pred_region
    _
  $region21: #{tpu_custom_call.1} parent=0 // pred_fallthru
    _

</llo_original>
